<compile_context>
chip_gen: v6e
topology: v6e:2x2x1
jax: 0.10.0
libtpu: 0.0.40
codegen_flags: <defaults>
</compile_context>

<pallas_src>
import functools
import math

import jax
import jax.numpy as jnp
from jax.experimental import pallas as pl
from jax.experimental.pallas import tpu as pltpu


# ---------------------------------------------------------------------------
# Generation-aware sizing helpers
# ---------------------------------------------------------------------------
def _round_up(x, a):
    return (x + a - 1) // a * a


def _pick_tile(dim, cap, align):
    """Largest multiple of `align` that divides `dim` and is <= min(cap, dim)."""
    assert dim % align == 0
    b = max(align, (min(cap, dim) // align) * align)
    while dim % b != 0:
        b -= align
    return b


def _vmem_limit_bytes():
    """Scoped-VMEM budget: ~3/4 of physical, capped at 112 MiB.

    v5e/v6e have 128 MiB physical VMEM (-> ~96 MiB budget); v7x has 64 MiB per
    TensorCore (-> ~48 MiB).  Falls back to a safe 48 MiB if the query fails.
    """
    phys = 64 * 1024 * 1024
    try:
        info = pltpu.get_tpu_info()
        for attr in ("vmem_capacity_bytes", "vmem_bytes"):
            v = getattr(info, attr, None)
            if isinstance(v, int) and v > 0:
                phys = v
                break
    except Exception:
        pass
    return int(max(32 * 1024 * 1024, min(phys * 3 // 4, 112 * 1024 * 1024)))


def _num_tensorcores():
    """Best-effort TensorCore-per-chip count (v7x has 2); defaults to 1."""
    try:
        info = pltpu.get_tpu_info()
        for attr in ("num_cores", "tensorcore_count", "num_tensorcores",
                     "cores_per_chip"):
            v = getattr(info, attr, None)
            if isinstance(v, int) and v > 0:
                return v
    except Exception:
        pass
    try:
        v = getattr(jax.devices()[0], "num_cores", None)
        if isinstance(v, int) and v > 0:
            return v
    except Exception:
        pass
    return 1


# ---------------------------------------------------------------------------
# In-kernel math helpers (shared by both kernel variants)
# ---------------------------------------------------------------------------
def _row_normalize_split(x):
    """F.normalize(x, dim=1), then split into bf16 hi/lo for the bf16x3 matmul."""
    inv = jax.lax.rsqrt(jnp.maximum(jnp.sum(x * x, axis=1, keepdims=True), 1e-24))
    xn = x * inv
    hi = xn.astype(jnp.bfloat16)
    lo = (xn - hi.astype(jnp.float32)).astype(jnp.bfloat16)
    return hi, lo


def _col_normalize_split(w):
    """F.normalize(W, dim=0) of a streamed (F, tc) tile, split into bf16 hi/lo."""
    inv = jax.lax.rsqrt(jnp.maximum(jnp.sum(w * w, axis=0, keepdims=True), 1e-24))
    wn = w * inv
    hi = wn.astype(jnp.bfloat16)
    lo = (wn - hi.astype(jnp.float32)).astype(jnp.bfloat16)
    return hi, lo


def _dot_bf16x3(xh, xl, wh, wl):
    """~f32-accurate cosa from three bf16 MXU passes (drops the lo*lo term).

    Avoids the 3-6x slower f32 multi-pass MXU emulation while keeping |err|
    in cosa ~1e-5, small enough that exp(s*cosa) at s=64 stays within ~1e-3.
    """
    f32 = jnp.float32
    return (jnp.dot(xh, wh, preferred_element_type=f32)
            + jnp.dot(xh, wl, preferred_element_type=f32)
            + jnp.dot(xl, wh, preferred_element_type=f32))


def _accumulate_exp_sum(acc_ref, cosa, s, col0, c_real, c_pad):
    """acc_ref (tb,128) += lane-group partial sums of exp(s*cosa).

    Padded classes are masked out.  Per-step work is pure VPU adds on whole
    vregs; the single cross-lane reduce happens only once, at the last class
    step, keeping the XLU off the MXU's vector-extended slots.
    """
    top0 = jnp.exp(cosa * s)
    if c_real != c_pad:  # static: compiled only when class padding exists
        cls = jax.lax.broadcasted_iota(jnp.int32, cosa.shape, 1) + col0
        top0 = jnp.where(cls < c_real, top0, 0.0)
    tc = cosa.shape[1]
    for g in range(tc // 128):  # static 128-lane groups -> whole-vreg adds
        acc_ref[...] += top0[:, g * 128:(g + 1) * 128]


def _margin_epilogue(cosa, bottom, cos_m, sin_m, s):
    """out = top / (sum(top0) - top0 + top) + 1e-10 with the angular margin."""
    # a = acos(cosa) in [0, pi] => sin(a) = sqrt(1 - cosa^2) >= 0 (exact identity).
    sina = jnp.sqrt(jnp.maximum(1.0 - cosa * cosa, 0.0))
    top = jnp.exp((cosa * cos_m - sina * sin_m) * s)   # exp(cos(a + m) * s)
    top0 = jnp.exp(cosa * s)                           # exp(cos(a) * s)
    denom = bottom - top0 + top
    # Approx EUP reciprocal + one Newton step (VPU) instead of a full divide.
    r = pl.reciprocal(denom, approx=True)
    r = r * (2.0 - denom * r)
    return top * r + 1e-10


# ---------------------------------------------------------------------------
# Fused kernel: grid=(batch tiles, class tiles).  The (tb, C_pad) cosa slab
# and the denominator live in VMEM for the whole class sweep; W columns are
# normalized on the fly; the margin epilogue runs at the last class step.
# ---------------------------------------------------------------------------
def _arc_fused_kernel(x_ref, w_ref, o_ref, xh_ref, xl_ref, acc_ref, slab_ref,
                      *, s, cos_m, sin_m, tc, nc, c_real, c_pad):
    j = pl.program_id(1)

    @pl.when(j == 0)
    def _init():
        hi, lo = _row_normalize_split(x_ref[...])
        xh_ref[...] = hi
        xl_ref[...] = lo
        acc_ref[...] = jnp.zeros_like(acc_ref)

    wh, wl = _col_normalize_split(w_ref[...])
    cosa = _dot_bf16x3(xh_ref[...], xl_ref[...], wh, wl)
    slab_ref[j] = cosa                              # dynamic leading-axis store
    _accumulate_exp_sum(acc_ref, cosa, s, j * tc, c_real, c_pad)

    @pl.when(j == nc - 1)
    def _finalize():
        bottom = jnp.sum(acc_ref[...], axis=1, keepdims=True)   # (tb, 1)
        for g in range(nc):                         # static unroll: static slices
            o_ref[:, g * tc:(g + 1) * tc] = _margin_epilogue(
                slab_ref[g], bottom, cos_m, sin_m, s)


# ---------------------------------------------------------------------------
# Fallback for class counts whose (tb, C_pad) slab does not fit VMEM:
# pass 1 streams cosa tiles to HBM while accumulating the denominator,
# pass 2 finalizes each tile in place (input_output_aliases).
# ---------------------------------------------------------------------------
def _arc_cosa_kernel(x_ref, w_ref, cosa_ref, bottom_ref, xh_ref, xl_ref, acc_ref,
                     *, s, tc, c_real, c_pad):
    j = pl.program_id(1)

    @pl.when(j == 0)
    def _init():
        hi, lo = _row_normalize_split(x_ref[...])
        xh_ref[...] = hi
        xl_ref[...] = lo
        acc_ref[...] = jnp.zeros_like(acc_ref)

    wh, wl = _col_normalize_split(w_ref[...])
    cosa = _dot_bf16x3(xh_ref[...], xl_ref[...], wh, wl)
    cosa_ref[...] = cosa
    _accumulate_exp_sum(acc_ref, cosa, s, j * tc, c_real, c_pad)

    @pl.when(j == pl.num_programs(1) - 1)
    def _finalize():
        bottom_ref[...] = jnp.sum(acc_ref[...], axis=1, keepdims=True)


def _arc_finalize_kernel(cosa_ref, bottom_ref, o_ref, *, cos_m, sin_m, s):
    o_ref[...] = _margin_epilogue(cosa_ref[...], bottom_ref[...], cos_m, sin_m, s)


# ---------------------------------------------------------------------------
# Host wrapper
# ---------------------------------------------------------------------------
def _fused_vmem_bytes(tb, tc, f, c_pad):
    out_blocks = 2 * tb * c_pad * 4           # double-buffered output slab
    slab = tb * c_pad * 4                     # resident cosa scratch
    w_blocks = 2 * f * tc * 4                 # double-buffered streamed W tile
    x_blocks = 2 * tb * f * 4                 # double-buffered feature tile
    scratch = 2 * tb * f * 2 + tb * 128 * 4   # bf16 hi/lo x + denominator acc
    work = 8 * tb * tc * 4                    # live temporaries headroom
    return out_blocks + slab + w_blocks + x_blocks + scratch + work


def arc_loss_pallas(feature, W, *, m=0.1, s=64.0, tb=None, tc=None,
                    force_fused=None):
    """feature: (B, F), W: (F, C) -> (B, C) float32 (matches the torch module)."""
    B, F = feature.shape
    F2, C = W.shape
    assert F == F2
    feature = feature.astype(jnp.float32)
    W = W.astype(jnp.float32)

    # Pad to (8, 128)-friendly sizes; padded classes are masked out of the
    # denominator in-kernel, padded rows/columns are sliced off at the end.
    B_pad = _round_up(B, 8)
    C_pad = _round_up(C, 128)
    if B_pad != B:
        feature = jnp.pad(feature, ((0, B_pad - B), (0, 0)))
    if C_pad != C:
        W = jnp.pad(W, ((0, 0), (0, C_pad - C)))

    vmem_limit = _vmem_limit_bytes()
    cores = _num_tensorcores()

    if tc is None:
        tc = _pick_tile(C_pad, 2048, 128)
    user_tb = tb is not None
    if tb is None:
        tb = _pick_tile(B_pad, 512, 8)         # big batch tiles => fewer W re-reads
        if cores >= 2 and B_pad >= 16:         # keep >=2 batch tiles for megacore
            tb = min(tb, _pick_tile(B_pad, max(8, B_pad // 2), 8))
    assert B_pad % tb == 0 and C_pad % tc == 0 and tb % 8 == 0 and tc % 128 == 0

    s = float(s)
    m = float(m)
    cos_m, sin_m = math.cos(m), math.sin(m)

    # Decide whether the per-batch-tile class slab fits on chip (shrinking tb
    # if needed); otherwise fall back to streaming cosa through HBM.
    fuse_budget = int(0.6 * vmem_limit)
    tb_f = tb
    if not user_tb:
        while _fused_vmem_bytes(tb_f, tc, F, C_pad) > fuse_budget and tb_f > 8:
            tb_f = _pick_tile(B_pad, max(8, tb_f // 2), 8)
    use_fused = _fused_vmem_bytes(tb_f, tc, F, C_pad) <= fuse_budget
    if force_fused is not None:
        use_fused = force_fused

    if use_fused:
        tb = tb_f
        nb, nc = B_pad // tb, C_pad // tc
        out = pl.pallas_call(
            functools.partial(_arc_fused_kernel, s=s, cos_m=cos_m, sin_m=sin_m,
                              tc=tc, nc=nc, c_real=C, c_pad=C_pad),
            out_shape=jax.ShapeDtypeStruct((B_pad, C_pad), jnp.float32),
            grid_spec=pltpu.PrefetchScalarGridSpec(
                num_scalar_prefetch=0,
                grid=(nb, nc),                                  # class axis = serial reduction
                in_specs=[
                    pl.BlockSpec((tb, F), lambda i, j: (i, 0)),   # x tile (per batch tile)
                    pl.BlockSpec((F, tc), lambda i, j: (0, j)),   # streamed W tile
                ],
                out_specs=pl.BlockSpec((tb, C_pad), lambda i, j: (i, 0)),  # resident slab
                scratch_shapes=[
                    pltpu.VMEM((tb, F), jnp.bfloat16),           # normalized x, hi
                    pltpu.VMEM((tb, F), jnp.bfloat16),           # normalized x, lo
                    pltpu.VMEM((tb, 128), jnp.float32),          # lane-group exp-sum acc
                    pltpu.VMEM((nc, tb, tc), jnp.float32),       # resident cosa slab
                ]),
            compiler_params=pltpu.CompilerParams(
                dimension_semantics=("parallel", "arbitrary"),
                vmem_limit_bytes=vmem_limit),
            cost_estimate=pl.CostEstimate(
                flops=int(6 * B_pad * F * C_pad + 14 * B_pad * C_pad
                          + 3 * nb * F * C_pad),
                transcendentals=int(4 * B_pad * C_pad + B_pad + nb * C_pad),
                bytes_accessed=int(4 * (B_pad * F + nb * F * C_pad
                                        + B_pad * C_pad))),
        )(feature, W)
    else:
        nb, nc = B_pad // tb, C_pad // tc
        cosa, bottom = pl.pallas_call(
            functools.partial(_arc_cosa_kernel, s=s, tc=tc, c_real=C, c_pad=C_pad),
            out_shape=(jax.ShapeDtypeStruct((B_pad, C_pad), jnp.float32),
                       jax.ShapeDtypeStruct((B_pad, 1), jnp.float32)),
            grid_spec=pltpu.PrefetchScalarGridSpec(
                num_scalar_prefetch=0,
                grid=(nb, nc),
                in_specs=[
                    pl.BlockSpec((tb, F), lambda i, j: (i, 0)),
                    pl.BlockSpec((F, tc), lambda i, j: (0, j)),
                ],
                out_specs=(
                    pl.BlockSpec((tb, tc), lambda i, j: (i, j)),
                    pl.BlockSpec((tb, 1), lambda i, j: (i, 0)),
                ),
                scratch_shapes=[
                    pltpu.VMEM((tb, F), jnp.bfloat16),
                    pltpu.VMEM((tb, F), jnp.bfloat16),
                    pltpu.VMEM((tb, 128), jnp.float32),
                ]),
            compiler_params=pltpu.CompilerParams(
                dimension_semantics=("parallel", "arbitrary"),
                vmem_limit_bytes=vmem_limit),
            cost_estimate=pl.CostEstimate(
                flops=int(6 * B_pad * F * C_pad + 5 * B_pad * C_pad
                          + 3 * nb * F * C_pad),
                transcendentals=int(B_pad * C_pad + B_pad + nb * C_pad),
                bytes_accessed=int(4 * (B_pad * F + nb * F * C_pad
                                        + B_pad * C_pad + B_pad))),
        )(feature, W)

        out = pl.pallas_call(
            functools.partial(_arc_finalize_kernel, cos_m=cos_m, sin_m=sin_m, s=s),
            out_shape=jax.ShapeDtypeStruct((B_pad, C_pad), jnp.float32),
            grid_spec=pltpu.PrefetchScalarGridSpec(
                num_scalar_prefetch=0,
                grid=(nb, nc),
                in_specs=[
                    pl.BlockSpec((tb, tc), lambda i, j: (i, j)),
                    pl.BlockSpec((tb, 1), lambda i, j: (i, 0)),
                ],
                out_specs=pl.BlockSpec((tb, tc), lambda i, j: (i, j)),
            ),
            compiler_params=pltpu.CompilerParams(
                dimension_semantics=("parallel", "parallel"),
                vmem_limit_bytes=vmem_limit),
            input_output_aliases={0: 0},      # finalize the cosa buffer in place
            cost_estimate=pl.CostEstimate(
                flops=int(10 * B_pad * C_pad),
                transcendentals=int(3 * B_pad * C_pad),
                bytes_accessed=int(4 * (2 * B_pad * C_pad + B_pad))),
        )(cosa, bottom)

    if B_pad != B or C_pad != C:
        out = out[:B, :C]
    return out


def arc_loss_ref(feature, W, *, m=0.1, s=64.0):
    """Pure-JAX reference mirroring the PyTorch forward exactly."""
    w_n = W / jnp.maximum(jnp.linalg.norm(W, axis=0, keepdims=True), 1e-12)
    x_n = feature / jnp.maximum(
        jnp.linalg.norm(feature, axis=1, keepdims=True), 1e-12)
    cosa = jnp.matmul(x_n, w_n, precision=jax.lax.Precision.HIGHEST)
    a = jnp.arccos(jnp.clip(cosa, -1.0, 1.0))
    top = jnp.exp(jnp.cos(a + m) * s)
    top0 = jnp.exp(jnp.cos(a) * s)
    bottom = jnp.sum(top0, axis=1, keepdims=True)
    return top / (bottom - top0 + top) + 1e-10


if __name__ == "__main__":
    # Small shapes consistent with the module: Loss(feature_num=32, cls_num=128)
    B, FEAT, CLS = 8, 32, 128
    m, s = 0.1, 64.0

    key = jax.random.PRNGKey(0)
    k_w, k_x = jax.random.split(key)
    W = jax.random.normal(k_w, (FEAT, CLS), dtype=jnp.float32)       # Parameter
    feature = jax.random.normal(k_x, (B, FEAT), dtype=jnp.float32)   # input

    ref = arc_loss_ref(feature, W, m=m, s=s)

    # 1) Default (fused) path: cosa slab + denominator resident in VMEM.
    out_fused = jax.block_until_ready(
        jax.jit(functools.partial(arc_loss_pallas, m=m, s=s))(feature, W))
    assert out_fused.shape == (B, CLS)
    assert jnp.allclose(out_fused, ref, rtol=3e-3, atol=1e-6), (
        float(jnp.max(jnp.abs(out_fused - ref))))

    # 2) Streamed fallback path (the large-class-count structure), forced here
    #    for coverage at small shapes.
    out_stream = jax.block_until_ready(
        jax.jit(functools.partial(arc_loss_pallas, m=m, s=s,
                                  force_fused=False))(feature, W))
    assert jnp.allclose(out_stream, ref, rtol=3e-3, atol=1e-6), (
        float(jnp.max(jnp.abs(out_stream - ref))))

    # 3) Non-aligned shapes exercise batch/class padding + class masking.
    B2, C2 = 6, 200
    W2 = jax.random.normal(jax.random.PRNGKey(1), (FEAT, C2), dtype=jnp.float32)
    f2 = jax.random.normal(jax.random.PRNGKey(2), (B2, FEAT), dtype=jnp.float32)
    ref2 = arc_loss_ref(f2, W2, m=m, s=s)
    out2 = jax.block_until_ready(
        jax.jit(functools.partial(arc_loss_pallas, m=m, s=s))(f2, W2))
    assert out2.shape == (B2, C2)
    assert jnp.allclose(out2, ref2, rtol=3e-3, atol=1e-6), (
        float(jnp.max(jnp.abs(out2 - ref2))))

    print("KERNEL_OK")
</pallas_src>

<mosaic_0001>
module attributes {stable_mosaic.version = 11 : i64} {
  func.func @_arc_fused_kernel(%arg0: i32, %arg1: i32, %arg2: memref<8x32xf32, #tpu.memory_space<vmem>>, %arg3: memref<32x128xf32, #tpu.memory_space<vmem>>, %arg4: memref<8x128xf32, #tpu.memory_space<vmem>>, %arg5: memref<8x32xbf16, #tpu.memory_space<vmem>>, %arg6: memref<8x32xbf16, #tpu.memory_space<vmem>>, %arg7: memref<8x128xf32, #tpu.memory_space<vmem>>, %arg8: memref<1x8x128xf32, #tpu.memory_space<vmem>>) attributes {dimension_semantics = [#tpu.dimension_semantics<parallel>, #tpu.dimension_semantics<arbitrary>], iteration_bounds = array<i64: 1, 1>, scalar_prefetch = 0 : i64, scratch_operands = 4 : i64, tpu.core_type = #tpu.core_type<tc>, window_params = [{transform_indices = @transform_0, window_bounds = array<i64: 8, 32>}, {transform_indices = @transform_1, window_bounds = array<i64: 32, 128>}, {transform_indices = @transform_2, window_bounds = array<i64: 8, 128>}]} {
    %c0_i32 = arith.constant 0 : i32
    %0 = arith.cmpi eq, %arg1, %c0_i32 : i32
    %1 = arith.extui %0 : i1 to i32
    %c0_i32_0 = arith.constant 0 : i32
    %2 = arith.cmpi ne, %1, %c0_i32_0 : i32
    scf.if %2 {
      %c0_19 = arith.constant 0 : index
      %c0_20 = arith.constant 0 : index
      %36 = vector.load %arg2[%c0_19, %c0_20] : memref<8x32xf32, #tpu.memory_space<vmem>>, vector<8x32xf32>
      %37 = arith.mulf %36, %36 : vector<8x32xf32>
      %cst_21 = arith.constant dense<0.000000e+00> : vector<8xf32>
      %38 = vector.multi_reduction <add>, %37, %cst_21 [1] : vector<8x32xf32> to vector<8xf32>
      %39 = vector.shape_cast %38 : vector<8xf32> to vector<8x1xf32>
      %cst_22 = arith.constant 1.000000e-24 : f32
      %40 = vector.broadcast %cst_22 : f32 to vector<8x1xf32>
      %41 = arith.maximumf %39, %40 : vector<8x1xf32>
      %42 = math.rsqrt %41 : vector<8x1xf32>
      %43 = vector.broadcast %42 : vector<8x1xf32> to vector<8x32xf32>
      %44 = arith.mulf %36, %43 : vector<8x32xf32>
      %45 = arith.truncf %44 : vector<8x32xf32> to vector<8x32xbf16>
      %46 = arith.extf %45 : vector<8x32xbf16> to vector<8x32xf32>
      %47 = arith.subf %44, %46 : vector<8x32xf32>
      %48 = arith.truncf %47 : vector<8x32xf32> to vector<8x32xbf16>
      %c0_23 = arith.constant 0 : index
      %c0_24 = arith.constant 0 : index
      %49 = vector.load %arg5[%c0_23, %c0_24] : memref<8x32xbf16, #tpu.memory_space<vmem>>, vector<8x32xbf16>
      tpu.vector_store %arg5[%c0_23, %c0_24], %45 {strides = array<i32>} : memref<8x32xbf16, #tpu.memory_space<vmem>>, vector<8x32xbf16>,
      %c0_25 = arith.constant 0 : index
      %c0_26 = arith.constant 0 : index
      %50 = vector.load %arg6[%c0_25, %c0_26] : memref<8x32xbf16, #tpu.memory_space<vmem>>, vector<8x32xbf16>
      tpu.vector_store %arg6[%c0_25, %c0_26], %48 {strides = array<i32>} : memref<8x32xbf16, #tpu.memory_space<vmem>>, vector<8x32xbf16>,
      %cst_27 = arith.constant 0.000000e+00 : f32
      %51 = vector.broadcast %cst_27 : f32 to vector<8x128xf32>
      %c0_28 = arith.constant 0 : index
      %c0_29 = arith.constant 0 : index
      %52 = vector.load %arg7[%c0_28, %c0_29] : memref<8x128xf32, #tpu.memory_space<vmem>>, vector<8x128xf32>
      tpu.vector_store %arg7[%c0_28, %c0_29], %51 {strides = array<i32>} : memref<8x128xf32, #tpu.memory_space<vmem>>, vector<8x128xf32>,
    } else {
    }
    %c0 = arith.constant 0 : index
    %c0_1 = arith.constant 0 : index
    %3 = vector.load %arg3[%c0, %c0_1] : memref<32x128xf32, #tpu.memory_space<vmem>>, vector<32x128xf32>
    %4 = arith.mulf %3, %3 : vector<32x128xf32>
    %cst = arith.constant dense<0.000000e+00> : vector<128xf32>
    %5 = vector.multi_reduction <add>, %4, %cst [0] : vector<32x128xf32> to vector<128xf32>
    %6 = vector.shape_cast %5 : vector<128xf32> to vector<1x128xf32>
    %cst_2 = arith.constant 1.000000e-24 : f32
    %7 = vector.broadcast %cst_2 : f32 to vector<1x128xf32>
    %8 = arith.maximumf %6, %7 : vector<1x128xf32>
    %9 = math.rsqrt %8 : vector<1x128xf32>
    %10 = vector.broadcast %9 : vector<1x128xf32> to vector<32x128xf32>
    %11 = arith.mulf %3, %10 : vector<32x128xf32>
    %12 = arith.truncf %11 : vector<32x128xf32> to vector<32x128xbf16>
    %13 = arith.extf %12 : vector<32x128xbf16> to vector<32x128xf32>
    %14 = arith.subf %11, %13 : vector<32x128xf32>
    %15 = arith.truncf %14 : vector<32x128xf32> to vector<32x128xbf16>
    %c0_3 = arith.constant 0 : index
    %c0_4 = arith.constant 0 : index
    %16 = vector.load %arg5[%c0_3, %c0_4] : memref<8x32xbf16, #tpu.memory_space<vmem>>, vector<8x32xbf16>
    %c0_5 = arith.constant 0 : index
    %c0_6 = arith.constant 0 : index
    %17 = vector.load %arg6[%c0_5, %c0_6] : memref<8x32xbf16, #tpu.memory_space<vmem>>, vector<8x32xbf16>
    %cst_7 = arith.constant dense<0.000000e+00> : vector<8x128xf32>
    %18 = tpu.matmul %16, %12, %cst_7 {dimension_numbers = #tpu.dot_dimension_numbers<[1], [0], [0], [1], [0, 0, 1, 1], [], []>} : vector<8x32xbf16>, vector<32x128xbf16>, vector<8x128xf32> -> vector<8x128xf32>
    %cst_8 = arith.constant dense<0.000000e+00> : vector<8x128xf32>
    %19 = tpu.matmul %16, %15, %cst_8 {dimension_numbers = #tpu.dot_dimension_numbers<[1], [0], [0], [1], [0, 0, 1, 1], [], []>} : vector<8x32xbf16>, vector<32x128xbf16>, vector<8x128xf32> -> vector<8x128xf32>
    %20 = arith.addf %18, %19 : vector<8x128xf32>
    %cst_9 = arith.constant dense<0.000000e+00> : vector<8x128xf32>
    %21 = tpu.matmul %17, %12, %cst_9 {dimension_numbers = #tpu.dot_dimension_numbers<[1], [0], [0], [1], [0, 0, 1, 1], [], []>} : vector<8x32xbf16>, vector<32x128xbf16>, vector<8x128xf32> -> vector<8x128xf32>
    %22 = arith.addf %20, %21 : vector<8x128xf32>
    %23 = arith.index_cast %arg1 : i32 to index
    %c0_10 = arith.constant 0 : index
    %c0_11 = arith.constant 0 : index
    %24 = vector.load %arg8[%23, %c0_10, %c0_11] : memref<1x8x128xf32, #tpu.memory_space<vmem>>, vector<1x8x128xf32>
    %25 = vector.shape_cast %24 : vector<1x8x128xf32> to vector<8x128xf32>
    %26 = vector.shape_cast %22 : vector<8x128xf32> to vector<1x8x128xf32>
    tpu.vector_store %arg8[%23, %c0_10, %c0_11], %26 {strides = array<i32>} : memref<1x8x128xf32, #tpu.memory_space<vmem>>, vector<1x8x128xf32>,
    %cst_12 = arith.constant 6.400000e+01 : f32
    %27 = vector.broadcast %cst_12 : f32 to vector<8x128xf32>
    %28 = arith.mulf %22, %27 : vector<8x128xf32>
    %29 = math.exp %28 : vector<8x128xf32>
    %c0_13 = arith.constant 0 : index
    %c0_14 = arith.constant 0 : index
    %30 = vector.load %arg7[%c0_13, %c0_14] : memref<8x128xf32, #tpu.memory_space<vmem>>, vector<8x128xf32>
    %31 = arith.addf %30, %29 : vector<8x128xf32>
    %c0_15 = arith.constant 0 : index
    %c0_16 = arith.constant 0 : index
    %32 = vector.load %arg7[%c0_15, %c0_16] : memref<8x128xf32, #tpu.memory_space<vmem>>, vector<8x128xf32>
    tpu.vector_store %arg7[%c0_15, %c0_16], %31 {strides = array<i32>} : memref<8x128xf32, #tpu.memory_space<vmem>>, vector<8x128xf32>,
    %c0_i32_17 = arith.constant 0 : i32
    %33 = arith.cmpi eq, %arg1, %c0_i32_17 : i32
    %34 = arith.extui %33 : i1 to i32
    %c0_i32_18 = arith.constant 0 : i32
    %35 = arith.cmpi ne, %34, %c0_i32_18 : i32
    scf.if %35 {
      %c0_19 = arith.constant 0 : index
      %c0_20 = arith.constant 0 : index
      %36 = vector.load %arg7[%c0_19, %c0_20] : memref<8x128xf32, #tpu.memory_space<vmem>>, vector<8x128xf32>
      %cst_21 = arith.constant dense<0.000000e+00> : vector<8xf32>
      %37 = vector.multi_reduction <add>, %36, %cst_21 [1] : vector<8x128xf32> to vector<8xf32>
      %38 = vector.shape_cast %37 : vector<8xf32> to vector<8x1xf32>
      %c0_22 = arith.constant 0 : index
      %c0_23 = arith.constant 0 : index
      %c0_24 = arith.constant 0 : index
      %39 = vector.load %arg8[%c0_22, %c0_23, %c0_24] : memref<1x8x128xf32, #tpu.memory_space<vmem>>, vector<1x8x128xf32>
      %40 = vector.shape_cast %39 : vector<1x8x128xf32> to vector<8x128xf32>
      %41 = arith.mulf %40, %40 : vector<8x128xf32>
      %cst_25 = arith.constant 1.000000e+00 : f32
      %42 = vector.broadcast %cst_25 : f32 to vector<8x128xf32>
      %43 = arith.subf %42, %41 : vector<8x128xf32>
      %cst_26 = arith.constant 0.000000e+00 : f32
      %44 = vector.broadcast %cst_26 : f32 to vector<8x128xf32>
      %45 = arith.maximumf %43, %44 : vector<8x128xf32>
      %46 = math.sqrt %45 : vector<8x128xf32>
      %cst_27 = arith.constant 0.995004177 : f32
      %47 = vector.broadcast %cst_27 : f32 to vector<8x128xf32>
      %48 = arith.mulf %40, %47 : vector<8x128xf32>
      %cst_28 = arith.constant 0.0998334139 : f32
      %49 = vector.broadcast %cst_28 : f32 to vector<8x128xf32>
      %50 = arith.mulf %46, %49 : vector<8x128xf32>
      %51 = arith.subf %48, %50 : vector<8x128xf32>
      %cst_29 = arith.constant 6.400000e+01 : f32
      %52 = vector.broadcast %cst_29 : f32 to vector<8x128xf32>
      %53 = arith.mulf %51, %52 : vector<8x128xf32>
      %54 = math.exp %53 : vector<8x128xf32>
      %cst_30 = arith.constant 6.400000e+01 : f32
      %55 = vector.broadcast %cst_30 : f32 to vector<8x128xf32>
      %56 = arith.mulf %40, %55 : vector<8x128xf32>
      %57 = math.exp %56 : vector<8x128xf32>
      %58 = vector.broadcast %38 : vector<8x1xf32> to vector<8x128xf32>
      %59 = arith.subf %58, %57 : vector<8x128xf32>
      %60 = arith.addf %59, %54 : vector<8x128xf32>
      %61 = tpu.reciprocal %60 {approx = true} : vector<8x128xf32> -> vector<8x128xf32>
      %62 = arith.mulf %60, %61 : vector<8x128xf32>
      %cst_31 = arith.constant 2.000000e+00 : f32
      %63 = vector.broadcast %cst_31 : f32 to vector<8x128xf32>
      %64 = arith.subf %63, %62 : vector<8x128xf32>
      %65 = arith.mulf %61, %64 : vector<8x128xf32>
      %66 = arith.mulf %54, %65 : vector<8x128xf32>
      %cst_32 = arith.constant 1.000000e-10 : f32
      %67 = vector.broadcast %cst_32 : f32 to vector<8x128xf32>
      %68 = arith.addf %66, %67 : vector<8x128xf32>
      %c0_33 = arith.constant 0 : index
      %c0_34 = arith.constant 0 : index
      %69 = vector.load %arg4[%c0_33, %c0_34] : memref<8x128xf32, #tpu.memory_space<vmem>>, vector<8x128xf32>
      tpu.vector_store %arg4[%c0_33, %c0_34], %68 {strides = array<i32>} : memref<8x128xf32, #tpu.memory_space<vmem>>, vector<8x128xf32>,
    } else {
    }
    return
  }
  func.func @transform_0(%arg0: i32, %arg1: i32) -> (i32, i32) {
    %c0_i32 = arith.constant 0 : i32
    %c0_i32_0 = arith.constant 0 : i32
    return %arg0, %c0_i32 : i32, i32
  }
  func.func @transform_1(%arg0: i32, %arg1: i32) -> (i32, i32) {
    %c0_i32 = arith.constant 0 : i32
    %c0_i32_0 = arith.constant 0 : i32
    return %c0_i32, %arg1 : i32, i32
  }
  func.func @transform_2(%arg0: i32, %arg1: i32) -> (i32, i32) {
    %c0_i32 = arith.constant 0 : i32
    %c0_i32_0 = arith.constant 0 : i32
    return %arg0, %c0_i32 : i32, i32
  }
}

</mosaic_0001>

<llo_original>
// kernel: arc_loss_pallas.1
$region0: #{arc_loss_pallas.1}
  #allocation0 [shape = 'u32[]', space=smem, size = 0x4, offset = 0x4, fixed_abs, tag = 'smem constant byte address 0x4 - core index']
  #allocation1 [shape = 'u32[144,128]{1,0:T(1,128)}', space=vmem, size = 0x12000, scoped, tag = 'internal scratch']
  #allocation2 [shape = 'bf16[8,32]{1,0:T(8,128)(2,1)}', space=vmem, size = 0x800, scoped, tag = 'scratch operand']
  #allocation3 [shape = 'bf16[8,32]{1,0:T(8,128)(2,1)}', space=vmem, size = 0x800, scoped, tag = 'scratch operand']
  #allocation4 [shape = 'f32[8,128]{1,0:T(8,128)}', space=vmem, size = 0x1000, scoped, tag = 'scratch operand']
  #allocation5 [shape = 'f32[1,8,128]{2,1,0:T(8,128)}', space=vmem, size = 0x1000, scoped, tag = 'scratch operand']
  %s0 = inlined_call_operand.hbm [shape: f32[8,32], index: 0, kind: input, shape index: {}]
  %s1 = inlined_call_operand.hbm [shape: f32[32,128], index: 1, kind: input, shape index: {}]
  %s2 = inlined_call_operand.hbm [shape: f32[8,128], index: 2, kind: output, shape index: {}]
  %s3 = sld [smem:[#allocation0]]
  $region34: #{arc_loss_pallas.1} parent=0
    _
  %s5 = ssub.s32 1, %s3
  %s6 = scalar_select 0, %s5, %s3
  $region1: #{arc_loss_pallas.1} parent=0
    #allocation6 [shape = 'u8[4096]{0}', space=vmem, size = 0x1000, scoped, tag = 'input window, operand 0, single buffered']
    #allocation7 [shape = 's32[1]{0}', space=sflag, size = 0x4, scoped, tag = 'scoped memory for arc_loss_pallas.1']
    #allocation8 [shape = 's32[1]{0}', space=sflag, size = 0x4, scoped, tag = 'scoped memory for arc_loss_pallas.1']
    #allocation9 [shape = 'u8[16384]{0}', space=vmem, size = 0x4000, scoped, tag = 'input window, operand 1, single buffered']
    #allocation10 [shape = 's32[1]{0}', space=sflag, size = 0x4, scoped, tag = 'scoped memory for arc_loss_pallas.1']
    #allocation11 [shape = 'u8[4096]{0}', space=vmem, size = 0x1000, scoped, tag = 'output window, operand 0, single buffered']
    %7 = vsyncpa [#allocation7], 0
    %8 = vsyncpa [#allocation10], 0
    %9 = vsyncpa [#allocation8], 0
    // Predicated region
    $region2: #{arc_loss_pallas.1} parent=1 // pred_check
      _
    $region3: #{arc_loss_pallas.1} parent=1 // pred_check_branch
      %11 = sbr.rel (0) target = $region5
    $region4: #{arc_loss_pallas.1} parent=1 // pred_region
      %s13 = ssub.s32 128, 128
      %14 = vsyncadd [#allocation7], %s13
      %s16 = sshll.u32 [#allocation6], 4
      %s17 = int_to_ptr.vmem [resolvable:$true] %s16
      %19 = dma.hbm_to_vmem [thread:$0]  %s0, 128, %s17, [#allocation7]
    $region5: #{arc_loss_pallas.1} parent=1 // pred_fallthru
      _
    // Predicated region
    $region6: #{arc_loss_pallas.1} parent=1 // pred_check
      _
    $region7: #{arc_loss_pallas.1} parent=1 // pred_check_branch
      %21 = sbr.rel (0) target = $region9
    $region8: #{arc_loss_pallas.1} parent=1 // pred_region
      %s23 = ssub.s32 512, 512
      %24 = vsyncadd [#allocation10], %s23
      %s25 = sshll.u32 [#allocation9], 4
      %s26 = int_to_ptr.vmem [resolvable:$true] %s25
      %31 = dma.hbm_to_vmem [thread:$0]  %s1, 512, %s26, [#allocation10], 128, 128, 8
    $region9: #{arc_loss_pallas.1} parent=1 // pred_fallthru
      _
    // Predicated region
    $region10: #{arc_loss_pallas.1} parent=1 // pred_check
      _
    $region11: #{arc_loss_pallas.1} parent=1 // pred_check_branch
      %33 = sbr.rel (0) target = $region13
    $region12: #{arc_loss_pallas.1} parent=1 // pred_region
      %34 = dma.done [#allocation7], 128
    $region13: #{arc_loss_pallas.1} parent=1 // pred_fallthru
      _
    // Predicated region
    $region14: #{arc_loss_pallas.1} parent=1 // pred_check
      _
    $region15: #{arc_loss_pallas.1} parent=1 // pred_check_branch
      %36 = sbr.rel (0) target = $region17
    $region16: #{arc_loss_pallas.1} parent=1 // pred_region
      %37 = dma.done [#allocation10], 512
    $region17: #{arc_loss_pallas.1} parent=1 // pred_fallthru
      _
    %p39 = scmp.eq.s32.totalorder 0, 0
    // Predicated region
    $region18: #{arc_loss_pallas.1} parent=1 // pred_check
      %p40 = pneg %p39
    $region19: #{arc_loss_pallas.1} parent=1 // pred_check_branch
      %42 = sbr.rel (%p40) target = $region21
    $region20: #{arc_loss_pallas.1} parent=1 // pred_region
      %v43 = vld [vmem:[#allocation6] sm:$0xff]
      %v44 = vmul.f32 %v43, %v43
      %vm45 = vcmask 261120
      %v46 = vsel %vm45, %v44, 0.0
      %47 = vadd.xlane.f32.xlu0 %v46
      %v48 = vpop.xlane.xlu0 %47
      %v49 = vmax.f32 %v48, 1e-24
      %v50 = vrsqrt.pop %v49
      %v51 = vmul.f32 %v43, %v50
      %v52 = vpack.c.bf16 %v51, %v51
      %v53 = vunpack.c.l.bf16 %v52
      %v54 = vsub.f32 %v51, %v53
      %v55 = vpack.c.bf16 %v54, %v54
      %vm56 = vcmask 257024
      %57 = vst.msk [vmem:[#allocation2] sm:$0xf] %vm56, %v52
      %58 = vst.msk [vmem:[#allocation3] sm:$0xf] %vm56, %v55
      %59 = vst [vmem:[#allocation4] sm:$0xff] 0.0
    $region21: #{arc_loss_pallas.1} parent=1 // pred_fallthru
      _
    %v60 = vld [vmem:[#allocation9] sm:$0xff]
    %v61 = vld [vmem:[#allocation9 + $0x8] sm:$0xff]
    %v62 = vld [vmem:[#allocation9 + $0x10] sm:$0xff]
    %v63 = vld [vmem:[#allocation9 + $0x18] sm:$0xff]
    %v64 = vmul.f32 %v60, %v60
    %v65 = vmul.f32 %v61, %v61
    %v66 = vmul.f32 %v62, %v62
    %v67 = vmul.f32 %v63, %v63
    %v68 = vadd.f32 %v64, %v65
    %v69 = vadd.f32 %v68, %v66
    %v70 = vadd.f32 %v69, %v67
    %v71 = vrot.slane %v70, 4
    %v72 = vadd.f32 %v70, %v71
    %v73 = vrot.slane %v72, 2
    %v74 = vadd.f32 %v72, %v73
    %v75 = vrot.slane %v74, 1
    %v76 = vadd.f32 %v74, %v75
    %v77 = vmax.f32 %v76, 1e-24
    %v78 = vrsqrt.pop %v77
    %v79 = vmul.f32 %v60, %v78
    %v80 = vmul.f32 %v61, %v78
    %v81 = vmul.f32 %v62, %v78
    %v82 = vmul.f32 %v63, %v78
    %v83 = vpack.c.bf16 %v80, %v79
    %v84 = vpack.c.bf16 %v82, %v81
    %v85 = vunpack.c.l.bf16 %v83
    %v86 = vunpack.c.h.bf16 %v83
    %v87 = vunpack.c.l.bf16 %v84
    %v88 = vunpack.c.h.bf16 %v84
    %v89 = vsub.f32 %v79, %v85
    %v90 = vsub.f32 %v80, %v86
    %v91 = vsub.f32 %v81, %v87
    %v92 = vsub.f32 %v82, %v88
    %v93 = vpack.c.bf16 %v90, %v89
    %v94 = vpack.c.bf16 %v92, %v91
    %v95 = vld [vmem:[#allocation2] sm:$0xf]
    %v96 = vld [vmem:[#allocation3] sm:$0xf]
    %vm97 = vcmask 261120
    %v99 = vsel %vm97, %v95, 0
    %101 = vmatprep.subr.bf16.mxu0 0
    %102 = vmatpush1.bf16.msra.mxu0 0
    %103 = vmatprep.subr.bf16.mxu0 0
    %104 = vmatpush1.bf16.msra.mxu0 0
    %105 = vmatprep.subr.bf16.mxu0 0
    %106 = vmatpush1.bf16.msra.mxu0 0
    %107 = vmatprep.subr.bf16.mxu0 0
    %108 = vmatpush1.bf16.msra.mxu0 0
    %109 = vmatprep.subr.bf16.mxu0 0
    %110 = vmatpush1.bf16.msra.mxu0 0
    %111 = vmatprep.subr.bf16.mxu0 0
    %112 = vmatpush1.bf16.msra.mxu0 0
    %113 = vmatprep.subr.bf16.mxu0 0
    %114 = vmatpush1.bf16.msra.mxu0 %v94
    %115 = vmatprep.subr.bf16.mxu0 0
    %116 = vmatpush1.bf16.msra.mxu0 %v93
    %117 = vmatprep.subr.bf16.mxu0 0
    %118 = vmatpush2.bf16.msra.mxu0 0
    %119 = vmatprep.subr.bf16.mxu0 0
    %120 = vmatpush2.bf16.msra.mxu0 0
    %121 = vmatprep.subr.bf16.mxu0 0
    %122 = vmatpush2.bf16.msra.mxu0 0
    %123 = vmatprep.subr.bf16.mxu0 0
    %124 = vmatpush2.bf16.msra.mxu0 0
    %125 = vmatprep.subr.bf16.mxu0 0
    %126 = vmatpush2.bf16.msra.mxu0 0
    %127 = vmatprep.subr.bf16.mxu0 0
    %128 = vmatpush2.bf16.msra.mxu0 0
    %129 = vmatprep.subr.bf16.mxu0 0
    %130 = vmatpush2.bf16.msra.mxu0 0
    %131 = vmatprep.subr.bf16.mxu0 0
    %132 = vmatpush2.bf16.msra.mxu0 0
    %133 = vmatprep.mubr.bf16.mxu0 0
    %134 = vmatmul.mubr.bf16.gmra.mxu0 %v99
    %v135 = vpop.f32.mrf.mxu0
    %v136 = vadd.f32 0.0, %v135
    %v137 = vpop.f32.mrf.mxu0
    %v138 = vpop.f32.mrf.mxu0
    %v139 = vpop.f32.mrf.mxu0
    %140 = vdwg.mxu0
    %141 = vmatprep.subr.bf16.mxu0 0
    %142 = vmatpush1.bf16.msra.mxu0 0
    %143 = vmatprep.subr.bf16.mxu0 0
    %144 = vmatpush1.bf16.msra.mxu0 0
    %145 = vmatprep.subr.bf16.mxu0 0
    %146 = vmatpush1.bf16.msra.mxu0 0
    %147 = vmatprep.subr.bf16.mxu0 0
    %148 = vmatpush1.bf16.msra.mxu0 0
    %149 = vmatprep.subr.bf16.mxu0 0
    %150 = vmatpush1.bf16.msra.mxu0 0
    %151 = vmatprep.subr.bf16.mxu0 0
    %152 = vmatpush1.bf16.msra.mxu0 0
    %153 = vmatprep.subr.bf16.mxu0 0
    %154 = vmatpush1.bf16.msra.mxu0 %v84
    %155 = vmatprep.subr.bf16.mxu0 0
    %156 = vmatpush1.bf16.msra.mxu0 %v83
    %157 = vmatprep.subr.bf16.mxu0 0
    %158 = vmatpush2.bf16.msra.mxu0 0
    %159 = vmatprep.subr.bf16.mxu0 0
    %160 = vmatpush2.bf16.msra.mxu0 0
    %161 = vmatprep.subr.bf16.mxu0 0
    %162 = vmatpush2.bf16.msra.mxu0 0
    %163 = vmatprep.subr.bf16.mxu0 0
    %164 = vmatpush2.bf16.msra.mxu0 0
    %165 = vmatprep.subr.bf16.mxu0 0
    %166 = vmatpush2.bf16.msra.mxu0 0
    %167 = vmatprep.subr.bf16.mxu0 0
    %168 = vmatpush2.bf16.msra.mxu0 0
    %169 = vmatprep.subr.bf16.mxu0 0
    %170 = vmatpush2.bf16.msra.mxu0 0
    %171 = vmatprep.subr.bf16.mxu0 0
    %172 = vmatpush2.bf16.msra.mxu0 0
    %173 = vmatprep.mubr.bf16.mxu0 0
    %174 = vmatmul.mubr.bf16.gmra.mxu0 %v99
    %v175 = vpop.f32.mrf.mxu0
    %v176 = vadd.f32 %v136, %v175
    %v177 = vpop.f32.mrf.mxu0
    %v178 = vpop.f32.mrf.mxu0
    %v179 = vpop.f32.mrf.mxu0
    %180 = vdwg.mxu0
    %v182 = vsel %vm97, %v96, 0
    %184 = vmatprep.subr.bf16.mxu0 0
    %185 = vmatpush1.bf16.msra.mxu0 0
    %186 = vmatprep.subr.bf16.mxu0 0
    %187 = vmatpush1.bf16.msra.mxu0 0
    %188 = vmatprep.subr.bf16.mxu0 0
    %189 = vmatpush1.bf16.msra.mxu0 0
    %190 = vmatprep.subr.bf16.mxu0 0
    %191 = vmatpush1.bf16.msra.mxu0 0
    %192 = vmatprep.subr.bf16.mxu0 0
    %193 = vmatpush1.bf16.msra.mxu0 0
    %194 = vmatprep.subr.bf16.mxu0 0
    %195 = vmatpush1.bf16.msra.mxu0 0
    %196 = vmatprep.subr.bf16.mxu0 0
    %197 = vmatpush1.bf16.msra.mxu0 %v84
    %198 = vmatprep.subr.bf16.mxu0 0
    %199 = vmatpush1.bf16.msra.mxu0 %v83
    %200 = vmatprep.subr.bf16.mxu0 0
    %201 = vmatpush2.bf16.msra.mxu0 0
    %202 = vmatprep.subr.bf16.mxu0 0
    %203 = vmatpush2.bf16.msra.mxu0 0
    %204 = vmatprep.subr.bf16.mxu0 0
    %205 = vmatpush2.bf16.msra.mxu0 0
    %206 = vmatprep.subr.bf16.mxu0 0
    %207 = vmatpush2.bf16.msra.mxu0 0
    %208 = vmatprep.subr.bf16.mxu0 0
    %209 = vmatpush2.bf16.msra.mxu0 0
    %210 = vmatprep.subr.bf16.mxu0 0
    %211 = vmatpush2.bf16.msra.mxu0 0
    %212 = vmatprep.subr.bf16.mxu0 0
    %213 = vmatpush2.bf16.msra.mxu0 0
    %214 = vmatprep.subr.bf16.mxu0 0
    %215 = vmatpush2.bf16.msra.mxu0 0
    %216 = vmatprep.mubr.bf16.mxu0 0
    %217 = vmatmul.mubr.bf16.gmra.mxu0 %v182
    %v218 = vpop.f32.mrf.mxu0
    %v219 = vadd.f32 0.0, %v218
    %v220 = vpop.f32.mrf.mxu0
    %v221 = vpop.f32.mrf.mxu0
    %v222 = vpop.f32.mrf.mxu0
    %223 = vdwg.mxu0
    %v224 = vadd.f32 %v176, %v219
    %s225 = smul.u32 0, 8
    %s226 = scalar_lea.vmem [#allocation5], %s225
    %227 = vst [vmem:[%s226] sm:$0xff] %v224
    %v228 = vmul.f32 %v224, 64.0
    %v229 = vmul.f32 %v228, 1.442695
    %v230 = vpow.pop %v229
    %v231 = vld [vmem:[#allocation4] sm:$0xff]
    %v232 = vadd.f32 %v231, %v230
    %233 = vst [vmem:[#allocation4] sm:$0xff] %v232
    // Predicated region
    $region22: #{arc_loss_pallas.1} parent=1 // pred_check
      %p234 = pneg %p39
    $region23: #{arc_loss_pallas.1} parent=1 // pred_check_branch
      %236 = sbr.rel (%p234) target = $region25
    $region24: #{arc_loss_pallas.1} parent=1 // pred_region
      %v237 = vld [vmem:[#allocation4] sm:$0xff]
      %238 = vadd.xlane.f32.xlu0 %v237
      %v239 = vpop.xlane.xlu0 %238
      %v240 = vld [vmem:[#allocation5] sm:$0xff]
      %v241 = vmul.f32 %v240, %v240
      %v242 = vsub.f32 1.0, %v241
      %v243 = vmax.f32 %v242, 0.0
      %v244 = vrsqrt.pop %v243
      %v245 = vmul.f32 %v243, %v244
      %vm246 = vcmp.eq.f32.partialorder %v243, inf
      %v247 = vsel %vm246, %v243, %v245
      %vm248 = vcmp.eq.f32.partialorder %v243, 0.0
      %v249 = vand.u32 %v243, 2147483648
      %v250 = vsel %vm248, %v249, %v247
      %v251 = vmul.f32 %v240, 0.9950042
      %v252 = vmul.f32 %v250, 0.099833414
      %v253 = vsub.f32 %v251, %v252
      %v254 = vmul.f32 %v253, 64.0
      %v255 = vmul.f32 %v254, 1.442695
      %v256 = vpow.pop %v255
      %v257 = vmul.f32 %v240, 64.0
      %v258 = vmul.f32 %v257, 1.442695
      %v259 = vpow.pop %v258
      %v260 = vsub.f32 %v239, %v259
      %v261 = vadd.f32 %v260, %v256
      %v262 = vrcp.pop %v261
      %v263 = vmul.f32 %v261, %v262
      %v264 = vsub.f32 2.0, %v263
      %v265 = vmul.f32 %v262, %v264
      %v266 = vmul.f32 %v256, %v265
      %v267 = vadd.f32 %v266, 1e-10
      %268 = vst [vmem:[#allocation11] sm:$0xff] %v267
    $region25: #{arc_loss_pallas.1} parent=1 // pred_fallthru
      _
    // Predicated region
    $region26: #{arc_loss_pallas.1} parent=1 // pred_check
      _
    $region27: #{arc_loss_pallas.1} parent=1 // pred_check_branch
      %270 = sbr.rel (0) target = $region29
    $region28: #{arc_loss_pallas.1} parent=1 // pred_region
      %s272 = ssub.s32 128, 128
      %273 = vsyncadd [#allocation8], %s272
      %s275 = sshll.u32 [#allocation11], 4
      %s276 = int_to_ptr.vmem [resolvable:$true] %s275
      %278 = dma.vmem_to_hbm [thread:$0]  %s276, 128, %s2, [#allocation8]
    $region29: #{arc_loss_pallas.1} parent=1 // pred_fallthru
      _
    // Predicated region
    $region30: #{arc_loss_pallas.1} parent=1 // pred_check
      _
    $region31: #{arc_loss_pallas.1} parent=1 // pred_check_branch
      %280 = sbr.rel (0) target = $region33
    $region32: #{arc_loss_pallas.1} parent=1 // pred_region
      %281 = dma.done [#allocation8], 128
    $region33: #{arc_loss_pallas.1} parent=1 // pred_fallthru
      _
    %282 = vsyncpa [#allocation7], 1
    %283 = vsyncpa [#allocation10], 1
    %284 = vsyncpa [#allocation8], 1

</llo_original>
